<compile_context>
chip_gen: v7x
topology: tpu7x:2x2x1
jax: 0.10.0
libtpu: 0.0.40
codegen_flags: <defaults>
</compile_context>

<pallas_src>
import jax
import jax.numpy as jnp
from jax.experimental import pallas as pl
from jax.experimental.pallas import tpu as pltpu

ALPHA = 1.0   # unused in forward (kept for parity with the module)
BETA = 1.0    # unused in forward
GAMMA = -1.0  # with gamma = -1:  p_obs**gamma / L == 1 / n_obs


def _round_up(x, m):
    return ((x + m - 1) // m) * m


def _partial_bce_kernel(pred_ref, true_ref, mask_ref, out_ref, loss_acc, nobs_acc):
    l = pl.program_id(1)
    nl = pl.num_programs(1)

    @pl.when(l == 0)
    def _init():
        loss_acc[...] = jnp.zeros_like(loss_acc)
        nobs_acc[...] = jnp.zeros_like(nobs_acc)

    # Native dtypes in HBM/VMEM; cast to f32 in-vreg (free on the VPU).
    x = pred_ref[...].astype(jnp.float32)   # (TB, TL) logits
    y = true_ref[...].astype(jnp.float32)   # (TB, TL) targets
    m = mask_ref[...].astype(jnp.float32)   # (TB, TL) observation mask

    # Numerically-stable BCE with logits (== torch BCEWithLogits, reduction='none'):
    #   max(x, 0) - x*y + log1p(exp(-|x|))
    loss = (jnp.maximum(x, 0.0) - x * y + jnp.log1p(jnp.exp(-jnp.abs(x)))) * m

    # Lane-chunked VPU accumulation into (TB, 128) scratch; no per-step XLU reduce.
    tl = loss.shape[1]
    acc_l = loss_acc[...]
    acc_m = nobs_acc[...]
    for c in range(tl // 128):
        sl = slice(c * 128, (c + 1) * 128)
        acc_l = acc_l + loss[:, sl]
        acc_m = acc_m + m[:, sl]
    loss_acc[...] = acc_l
    nobs_acc[...] = acc_m

    @pl.when(l == nl - 1)
    def _finalize():
        row_loss = jnp.sum(loss_acc[...], axis=1, keepdims=True)   # (TB, 1)
        n_obs = jnp.sum(nobs_acc[...], axis=1, keepdims=True)      # (TB, 1)
        # p_obs_normalizer * row_loss == row_loss / n_obs   (gamma = -1, exact)
        contrib = jnp.where(n_obs > 0.0, row_loss / n_obs, 0.0)    # guard padded rows
        out_ref[...] = jnp.broadcast_to(contrib, out_ref.shape)    # lane-dense store


def partial_bce(y_pred, y_true, y_mask, *, tb=256, tl=1024):
    """Scalar f32 loss with the same forward semantics as PartialBCE."""
    B, L = y_pred.shape

    tb = min(tb, _round_up(B, 8))      # multiple of 8  (sublane constraint)
    tl = min(tl, _round_up(L, 128))    # multiple of 128 (lane constraint)
    assert tb % 8 == 0 and tl % 128 == 0

    B_pad = _round_up(B, tb)
    L_pad = _round_up(L, tl)
    if (B_pad, L_pad) != (B, L):
        pad = ((0, B_pad - B), (0, L_pad - L))
        y_pred = jnp.pad(y_pred, pad)
        y_true = jnp.pad(y_true, pad)
        y_mask = jnp.pad(y_mask, pad)   # zero mask => zero contribution

    nb, nl = B_pad // tb, L_pad // tl

    per_row = pl.pallas_call(
        _partial_bce_kernel,
        out_shape=jax.ShapeDtypeStruct((B_pad, 128), jnp.float32),
        grid_spec=pltpu.PrefetchScalarGridSpec(
            num_scalar_prefetch=0,
            grid=(nb, nl),                               # reduction (L) axis last
            in_specs=[
                pl.BlockSpec((tb, tl), lambda b, l: (b, l)),
                pl.BlockSpec((tb, tl), lambda b, l: (b, l)),
                pl.BlockSpec((tb, tl), lambda b, l: (b, l)),
            ],
            out_specs=pl.BlockSpec((tb, 128), lambda b, l: (b, 0)),
            scratch_shapes=[
                pltpu.VMEM((tb, 128), jnp.float32),      # loss accumulator
                pltpu.VMEM((tb, 128), jnp.float32),      # n_obs accumulator
            ],
        ),
        compiler_params=pltpu.CompilerParams(
            dimension_semantics=("parallel", "arbitrary")),
    )(y_pred, y_true, y_mask)

    # Tiny epilogue: per-row contributions (padded rows are 0) -> batch mean.
    return jnp.sum(per_row[:, 0]) / jnp.float32(B)


def _partial_bce_ref(y_pred, y_true, y_mask):
    """Pure-JAX reference mirroring the PyTorch code (including pow(gamma))."""
    mask = y_mask.astype(jnp.float32)
    x = y_pred.astype(jnp.float32)
    y = y_true.astype(jnp.float32)
    loss = jnp.maximum(x, 0.0) - x * y + jnp.log1p(jnp.exp(-jnp.abs(x)))
    loss = loss * mask
    n_obs = jnp.sum(mask, axis=1)
    n_labels = mask.shape[1]
    p_obs = n_obs / n_labels
    p_obs_normalizer = jnp.power(p_obs, GAMMA) / n_labels
    return jnp.mean(p_obs_normalizer * jnp.sum(loss, axis=1))


if __name__ == "__main__":
    key = jax.random.PRNGKey(0)
    k1, k2, k3 = jax.random.split(key, 3)

    B, L = 16, 256  # batch, num_labels (small test shapes)
    y_pred = jax.random.normal(k1, (B, L), dtype=jnp.float32)
    y_true = (jax.random.uniform(k2, (B, L)) > 0.5).astype(jnp.float32)
    # Ensure every row has at least one observation (module precondition).
    y_mask = (jax.random.uniform(k3, (B, L)) > 0.3).astype(jnp.float32)
    y_mask = y_mask.at[:, 0].set(1.0)

    # Small tiles so the test exercises a real (2, 2) grid + reduction finalize.
    out = jax.block_until_ready(partial_bce(y_pred, y_true, y_mask, tb=8, tl=128))
    ref = jax.block_until_ready(_partial_bce_ref(y_pred, y_true, y_mask))

    assert jnp.allclose(out, ref, rtol=1e-5, atol=1e-5), (out, ref)
    print("KERNEL_OK")
</pallas_src>

<mosaic_0001>
module attributes {stable_mosaic.version = 11 : i64} {
  func.func @_partial_bce_kernel(%arg0: i32, %arg1: i32, %arg2: memref<8x128xf32, #tpu.memory_space<vmem>>, %arg3: memref<8x128xf32, #tpu.memory_space<vmem>>, %arg4: memref<8x128xf32, #tpu.memory_space<vmem>>, %arg5: memref<8x128xf32, #tpu.memory_space<vmem>>, %arg6: memref<8x128xf32, #tpu.memory_space<vmem>>, %arg7: memref<8x128xf32, #tpu.memory_space<vmem>>) attributes {dimension_semantics = [#tpu.dimension_semantics<parallel>, #tpu.dimension_semantics<arbitrary>], iteration_bounds = array<i64: 2, 2>, scalar_prefetch = 0 : i64, scratch_operands = 2 : i64, tpu.core_type = #tpu.core_type<tc>, window_params = [{transform_indices = @transform_0, window_bounds = array<i64: 8, 128>}, {transform_indices = @transform_1, window_bounds = array<i64: 8, 128>}, {transform_indices = @transform_2, window_bounds = array<i64: 8, 128>}, {transform_indices = @transform_3, window_bounds = array<i64: 8, 128>}]} {
    %c0_i32 = arith.constant 0 : i32
    %0 = arith.cmpi eq, %arg1, %c0_i32 : i32
    %1 = arith.extui %0 : i1 to i32
    %c0_i32_0 = arith.constant 0 : i32
    %2 = arith.cmpi ne, %1, %c0_i32_0 : i32
    scf.if %2 {
      %cst_16 = arith.constant 0.000000e+00 : f32
      %26 = vector.broadcast %cst_16 : f32 to vector<8x128xf32>
      %c0_17 = arith.constant 0 : index
      %c0_18 = arith.constant 0 : index
      %27 = vector.load %arg6[%c0_17, %c0_18] : memref<8x128xf32, #tpu.memory_space<vmem>>, vector<8x128xf32>
      tpu.vector_store %arg6[%c0_17, %c0_18], %26 {strides = array<i32>} : memref<8x128xf32, #tpu.memory_space<vmem>>, vector<8x128xf32>,
      %cst_19 = arith.constant 0.000000e+00 : f32
      %28 = vector.broadcast %cst_19 : f32 to vector<8x128xf32>
      %c0_20 = arith.constant 0 : index
      %c0_21 = arith.constant 0 : index
      %29 = vector.load %arg7[%c0_20, %c0_21] : memref<8x128xf32, #tpu.memory_space<vmem>>, vector<8x128xf32>
      tpu.vector_store %arg7[%c0_20, %c0_21], %28 {strides = array<i32>} : memref<8x128xf32, #tpu.memory_space<vmem>>, vector<8x128xf32>,
    } else {
    }
    %c0 = arith.constant 0 : index
    %c0_1 = arith.constant 0 : index
    %3 = vector.load %arg2[%c0, %c0_1] : memref<8x128xf32, #tpu.memory_space<vmem>>, vector<8x128xf32>
    %c0_2 = arith.constant 0 : index
    %c0_3 = arith.constant 0 : index
    %4 = vector.load %arg3[%c0_2, %c0_3] : memref<8x128xf32, #tpu.memory_space<vmem>>, vector<8x128xf32>
    %c0_4 = arith.constant 0 : index
    %c0_5 = arith.constant 0 : index
    %5 = vector.load %arg4[%c0_4, %c0_5] : memref<8x128xf32, #tpu.memory_space<vmem>>, vector<8x128xf32>
    %cst = arith.constant 0.000000e+00 : f32
    %6 = vector.broadcast %cst : f32 to vector<8x128xf32>
    %7 = arith.maximumf %3, %6 : vector<8x128xf32>
    %8 = arith.mulf %3, %4 : vector<8x128xf32>
    %9 = arith.subf %7, %8 : vector<8x128xf32>
    %10 = math.absf %3 : vector<8x128xf32>
    %cst_6 = arith.constant 0.000000e+00 : f32
    %11 = vector.broadcast %cst_6 : f32 to vector<8x128xf32>
    %12 = arith.subf %11, %10 : vector<8x128xf32>
    %13 = math.exp %12 : vector<8x128xf32>
    %14 = math.log1p %13 : vector<8x128xf32>
    %15 = arith.addf %9, %14 : vector<8x128xf32>
    %16 = arith.mulf %15, %5 : vector<8x128xf32>
    %c0_7 = arith.constant 0 : index
    %c0_8 = arith.constant 0 : index
    %17 = vector.load %arg6[%c0_7, %c0_8] : memref<8x128xf32, #tpu.memory_space<vmem>>, vector<8x128xf32>
    %c0_9 = arith.constant 0 : index
    %c0_10 = arith.constant 0 : index
    %18 = vector.load %arg7[%c0_9, %c0_10] : memref<8x128xf32, #tpu.memory_space<vmem>>, vector<8x128xf32>
    %19 = arith.addf %17, %16 : vector<8x128xf32>
    %20 = arith.addf %18, %5 : vector<8x128xf32>
    %c0_11 = arith.constant 0 : index
    %c0_12 = arith.constant 0 : index
    %21 = vector.load %arg6[%c0_11, %c0_12] : memref<8x128xf32, #tpu.memory_space<vmem>>, vector<8x128xf32>
    tpu.vector_store %arg6[%c0_11, %c0_12], %19 {strides = array<i32>} : memref<8x128xf32, #tpu.memory_space<vmem>>, vector<8x128xf32>,
    %c0_13 = arith.constant 0 : index
    %c0_14 = arith.constant 0 : index
    %22 = vector.load %arg7[%c0_13, %c0_14] : memref<8x128xf32, #tpu.memory_space<vmem>>, vector<8x128xf32>
    tpu.vector_store %arg7[%c0_13, %c0_14], %20 {strides = array<i32>} : memref<8x128xf32, #tpu.memory_space<vmem>>, vector<8x128xf32>,
    %c1_i32 = arith.constant 1 : i32
    %23 = arith.cmpi eq, %arg1, %c1_i32 : i32
    %24 = arith.extui %23 : i1 to i32
    %c0_i32_15 = arith.constant 0 : i32
    %25 = arith.cmpi ne, %24, %c0_i32_15 : i32
    scf.if %25 {
      %c0_16 = arith.constant 0 : index
      %c0_17 = arith.constant 0 : index
      %26 = vector.load %arg6[%c0_16, %c0_17] : memref<8x128xf32, #tpu.memory_space<vmem>>, vector<8x128xf32>
      %cst_18 = arith.constant dense<0.000000e+00> : vector<8xf32>
      %27 = vector.multi_reduction <add>, %26, %cst_18 [1] : vector<8x128xf32> to vector<8xf32>
      %28 = vector.shape_cast %27 : vector<8xf32> to vector<8x1xf32>
      %c0_19 = arith.constant 0 : index
      %c0_20 = arith.constant 0 : index
      %29 = vector.load %arg7[%c0_19, %c0_20] : memref<8x128xf32, #tpu.memory_space<vmem>>, vector<8x128xf32>
      %cst_21 = arith.constant dense<0.000000e+00> : vector<8xf32>
      %30 = vector.multi_reduction <add>, %29, %cst_21 [1] : vector<8x128xf32> to vector<8xf32>
      %31 = vector.shape_cast %30 : vector<8xf32> to vector<8x1xf32>
      %cst_22 = arith.constant 0.000000e+00 : f32
      %32 = vector.broadcast %cst_22 : f32 to vector<8x1xf32>
      %33 = arith.cmpf ogt, %31, %32 : vector<8x1xf32>
      %34 = arith.divf %28, %31 : vector<8x1xf32>
      %cst_23 = arith.constant 0.000000e+00 : f32
      %35 = vector.broadcast %cst_23 : f32 to vector<8x1xf32>
      %36 = arith.select %33, %34, %35 : vector<8x1xi1>, vector<8x1xf32>
      %37 = vector.shape_cast %36 : vector<8x1xf32> to vector<8x1xf32>
      %38 = vector.broadcast %37 : vector<8x1xf32> to vector<8x128xf32>
      %c0_24 = arith.constant 0 : index
      %c0_25 = arith.constant 0 : index
      %39 = vector.load %arg5[%c0_24, %c0_25] : memref<8x128xf32, #tpu.memory_space<vmem>>, vector<8x128xf32>
      tpu.vector_store %arg5[%c0_24, %c0_25], %38 {strides = array<i32>} : memref<8x128xf32, #tpu.memory_space<vmem>>, vector<8x128xf32>,
    } else {
    }
    return
  }
  func.func @transform_0(%arg0: i32, %arg1: i32) -> (i32, i32) {
    %c0_i32 = arith.constant 0 : i32
    return %arg0, %arg1 : i32, i32
  }
  func.func @transform_1(%arg0: i32, %arg1: i32) -> (i32, i32) {
    %c0_i32 = arith.constant 0 : i32
    return %arg0, %arg1 : i32, i32
  }
  func.func @transform_2(%arg0: i32, %arg1: i32) -> (i32, i32) {
    %c0_i32 = arith.constant 0 : i32
    return %arg0, %arg1 : i32, i32
  }
  func.func @transform_3(%arg0: i32, %arg1: i32) -> (i32, i32) {
    %c0_i32 = arith.constant 0 : i32
    %c0_i32_0 = arith.constant 0 : i32
    return %arg0, %c0_i32 : i32, i32
  }
}

</mosaic_0001>

<llo_original>
// kernel: tpu_custom_call.1
$region0: #{tpu_custom_call.1}
  #allocation0 [shape = 'u32[]', space=smem, size = 0x4, offset = 0x4, fixed_abs, tag = 'smem constant byte address 0x4 - core index']
  #allocation1 [shape = 'u32[144,128]{1,0:T(1,128)}', space=vmem, size = 0x12000, scoped, tag = 'internal scratch']
  #allocation2 [shape = 'f32[8,128]{1,0:T(8,128)}', space=vmem, size = 0x1000, scoped, tag = 'scratch operand']
  #allocation3 [shape = 'f32[8,128]{1,0:T(8,128)}', space=vmem, size = 0x1000, scoped, tag = 'scratch operand']
  %s0 = inlined_call_operand.hbm [shape: f32[16,256], index: 0, kind: input, shape index: {}]
  %s1 = inlined_call_operand.hbm [shape: f32[16,256], index: 1, kind: input, shape index: {}]
  %s2 = inlined_call_operand.hbm [shape: f32[16,256], index: 2, kind: input, shape index: {}]
  %s3 = inlined_call_operand.hbm [shape: f32[16,128], index: 3, kind: output, shape index: {}]
  %s4 = sld [smem:[#allocation0]]
  $region65: #{tpu_custom_call.1} parent=0
    _
  %s6 = ssub.s32 1, %s4
  %s7 = scalar_select 0, %s6, %s4
  $region1: #{tpu_custom_call.1} parent=0
    #allocation4 [shape = 'u8[8192]{0}', space=vmem, size = 0x2000, scoped, tag = 'input window, operand 0']
    #allocation5 [shape = 's32[2]{0}', space=sflag, size = 0x8, scoped, tag = 'scoped memory for tpu_custom_call.1']
    #allocation6 [shape = 's32[2]{0}', space=sflag, size = 0x8, scoped, tag = 'scoped memory for tpu_custom_call.1']
    #allocation7 [shape = 'u8[8192]{0}', space=vmem, size = 0x2000, scoped, tag = 'input window, operand 1']
    #allocation8 [shape = 's32[2]{0}', space=sflag, size = 0x8, scoped, tag = 'scoped memory for tpu_custom_call.1']
    #allocation9 [shape = 'u8[8192]{0}', space=vmem, size = 0x2000, scoped, tag = 'input window, operand 2']
    #allocation10 [shape = 'u8[8192]{0}', space=vmem, size = 0x2000, scoped, tag = 'output window, operand 0']
    %8 = vsyncpa [#allocation5], 0
    %s9 = scalar_lea.sflag [#allocation5], 1
    %10 = vsyncpa %s9, 0
    %11 = vsyncpa [#allocation8], 0
    %s12 = scalar_lea.sflag [#allocation8], 1
    %13 = vsyncpa %s12, 0
    %14 = vsyncpa [#allocation6], 0
    %s15 = scalar_lea.sflag [#allocation6], 1
    %16 = vsyncpa %s15, 0
    loop: start=0, step=1, limit=6
    $region2: #{tpu_custom_call.1} parent=1 // loop_pre_header
      _
    $region3: #{tpu_custom_call.1} parent=1 // loop_header
      %s18 = sphi 0, %s22
      %p19 = scmp.ge.s32.totalorder %s18, 6
      %s25 = sphi 0, %s37
      %s26 = sphi 0, %s33
      %s27 = sphi 0, %s25
      %s28 = sphi 0, %s26
      %s29 = sphi 0, %s27
      %s30 = sphi 0, %s28
      %s42 = sphi 0, %s44
      %s45 = sphi 0, %s42
      %s46 = sphi 0, %s45
      %s62 = sphi 0, %s46
      %s70 = sphi 0, %s72
      %s73 = sphi 0, %s70
      %s74 = sphi 0, %s73
      %s90 = sphi 0, %s74
      %s98 = sphi 0, %s100
      %s101 = sphi 0, %s98
      %s102 = sphi 0, %s101
      %s118 = sphi 0, %s102
      %s124 = sphi 0, %s126
      %s127 = sphi 0, %s124
      %s128 = sphi 0, %s127
      %s144 = sphi 0, %s128
    $region4: #{tpu_custom_call.1} parent=1 // loop_header_branch
      %21 = sbr.rel (%p19) target = $region8
    $region5: #{tpu_custom_call.1} parent=1 // loop_body
      %s23 = ssub.s32 %s18, 1
      %s24 = ssub.s32 %s18, 2
      %s31 = sadd.s32 1, %s26
      %p32 = scmp.ge.s32.totalorder %s31, 2
      %s33 = scalar_select %p32, 0, %s31
      %s34 = sadd.s32 1, %s25
      %s35 = scalar_select %p32, %s34, %s25
      %p36 = scmp.ge.s32.totalorder %s35, 2
      %s37 = scalar_select %p36, 0, %s35
      %s38 = ssub.s32 %s25, %s37
      %s39 = ssub.s32 %s26, %s33
      %s40 = sor.u32 %s38, %s39
      %p41 = scmp.eq.s32.totalorder %s40, 0
      %s43 = sadd.s32 %s42, 1
      %s44 = scalar_select %p41, %s42, %s43
      %p47 = pneg %p41
      %p48 = scmp.eq.s32.totalorder %s18, 3
      %p49 = por %p47, %p48
      %p50 = scmp.ne.s32.totalorder %s42, %s45
      %p51 = scmp.eq.s32.totalorder %s18, 0
      %p52 = por %p50, %p51
      %p53 = scmp.ne.s32.totalorder %s42, %s45
      %p54 = scmp.eq.s32.totalorder %s23, 3
      %p55 = por %p53, %p54
      %p56 = scmp.ne.s32.totalorder %s45, %s46
      %p57 = scmp.eq.s32.totalorder %s23, 0
      %p58 = por %p56, %p57
      %p59 = scmp.ne.s32.totalorder %s45, %s46
      %p60 = scmp.eq.s32.totalorder %s24, 3
      %p61 = por %p59, %p60
      %p63 = scmp.ne.s32.totalorder %s46, %s62
      %p64 = scmp.eq.s32.totalorder %s24, 0
      %p65 = por %p63, %p64
      %s66 = ssub.s32 %s25, %s37
      %s67 = ssub.s32 %s26, %s33
      %s68 = sor.u32 %s66, %s67
      %p69 = scmp.eq.s32.totalorder %s68, 0
      %s71 = sadd.s32 %s70, 1
      %s72 = scalar_select %p69, %s70, %s71
      %p75 = pneg %p69
      %p76 = scmp.eq.s32.totalorder %s18, 3
      %p77 = por %p75, %p76
      %p78 = scmp.ne.s32.totalorder %s70, %s73
      %p79 = scmp.eq.s32.totalorder %s18, 0
      %p80 = por %p78, %p79
      %p81 = scmp.ne.s32.totalorder %s70, %s73
      %p82 = scmp.eq.s32.totalorder %s23, 3
      %p83 = por %p81, %p82
      %p84 = scmp.ne.s32.totalorder %s73, %s74
      %p85 = scmp.eq.s32.totalorder %s23, 0
      %p86 = por %p84, %p85
      %p87 = scmp.ne.s32.totalorder %s73, %s74
      %p88 = scmp.eq.s32.totalorder %s24, 3
      %p89 = por %p87, %p88
      %p91 = scmp.ne.s32.totalorder %s74, %s90
      %p92 = scmp.eq.s32.totalorder %s24, 0
      %p93 = por %p91, %p92
      %s94 = ssub.s32 %s25, %s37
      %s95 = ssub.s32 %s26, %s33
      %s96 = sor.u32 %s94, %s95
      %p97 = scmp.eq.s32.totalorder %s96, 0
      %s99 = sadd.s32 %s98, 1
      %s100 = scalar_select %p97, %s98, %s99
      %p103 = pneg %p97
      %p104 = scmp.eq.s32.totalorder %s18, 3
      %p105 = por %p103, %p104
      %p106 = scmp.ne.s32.totalorder %s98, %s101
      %p107 = scmp.eq.s32.totalorder %s18, 0
      %p108 = por %p106, %p107
      %p109 = scmp.ne.s32.totalorder %s98, %s101
      %p110 = scmp.eq.s32.totalorder %s23, 3
      %p111 = por %p109, %p110
      %p112 = scmp.ne.s32.totalorder %s101, %s102
      %p113 = scmp.eq.s32.totalorder %s23, 0
      %p114 = por %p112, %p113
      %p115 = scmp.ne.s32.totalorder %s101, %s102
      %p116 = scmp.eq.s32.totalorder %s24, 3
      %p117 = por %p115, %p116
      %p119 = scmp.ne.s32.totalorder %s102, %s118
      %p120 = scmp.eq.s32.totalorder %s24, 0
      %p121 = por %p119, %p120
      %s122 = ssub.s32 %s25, %s37
      %p123 = scmp.eq.s32.totalorder %s122, 0
      %s125 = sadd.s32 %s124, 1
      %s126 = scalar_select %p123, %s124, %s125
      %p129 = pneg %p123
      %p130 = scmp.eq.s32.totalorder %s18, 3
      %p131 = por %p129, %p130
      %p132 = scmp.ne.s32.totalorder %s124, %s127
      %p133 = scmp.eq.s32.totalorder %s18, 0
      %p134 = por %p132, %p133
      %p135 = scmp.ne.s32.totalorder %s124, %s127
      %p136 = scmp.eq.s32.totalorder %s23, 3
      %p137 = por %p135, %p136
      %p138 = scmp.ne.s32.totalorder %s127, %s128
      %p139 = scmp.eq.s32.totalorder %s23, 0
      %p140 = por %p138, %p139
      %p141 = scmp.ne.s32.totalorder %s127, %s128
      %p142 = scmp.eq.s32.totalorder %s24, 3
      %p143 = por %p141, %p142
      %p145 = scmp.ne.s32.totalorder %s128, %s144
      %p146 = scmp.eq.s32.totalorder %s24, 0
      %p147 = por %p145, %p146
      %p148 = scmp.le.s32.totalorder 1, %s18
      %p149 = scmp.lt.s32.totalorder %s18, 5
      %p150 = pnand %p148, %p149
      %p151 = pneg %p150
      // Predicated region
      $region9: #{tpu_custom_call.1} parent=5 // pred_check
        _
      $region10: #{tpu_custom_call.1} parent=5 // pred_check_branch
        %153 = sbr.rel (%p150) target = $region12
      $region11: #{tpu_custom_call.1} parent=5 // pred_region
        %s154 = ssub.s32 %s18, 1
      $region12: #{tpu_custom_call.1} parent=5 // pred_fallthru
        _
      %p155 = scmp.lt.s32.totalorder %s18, 4
      // Predicated region
      $region13: #{tpu_custom_call.1} parent=5 // pred_check
        %p156 = pneg %p155
      $region14: #{tpu_custom_call.1} parent=5 // pred_check_branch
        %158 = sbr.rel (%p156) target = $region16
      $region15: #{tpu_custom_call.1} parent=5 // pred_region
        // Predicated region
        $region17: #{tpu_custom_call.1} parent=15 // pred_check
          %p159 = pneg %p52
        $region18: #{tpu_custom_call.1} parent=15 // pred_check_branch
          %161 = sbr.rel (%p159) target = $region20
        $region19: #{tpu_custom_call.1} parent=15 // pred_region
          %s162 = sand.u32 %s42, 1
          %s163 = scalar_lea.sflag [#allocation5], %s162
          %s164 = sand.u32 %s42, 1
          %s165 = smul.addr %s164, 8
          %s166 = scalar_lea.vmem [#allocation4], %s165
          %s168 = ssub.s32 128, 128
          %169 = vsyncadd %s163, %s168
          %s170 = smul.addr %s25, 2
          %s171 = sadd.s32 %s26, %s170
          %s172 = smul.addr %s171, 128
          %s173 = scalar_lea.hbm %s0, %s172
          %s175 = sshll.u32 %s166, 4
          %s176 = int_to_ptr.vmem [resolvable:$true] %s175
          %178 = dma.hbm_to_vmem [thread:$0]  %s173, 128, %s176, %s163
        $region20: #{tpu_custom_call.1} parent=15 // pred_fallthru
          _
        // Predicated region
        $region21: #{tpu_custom_call.1} parent=15 // pred_check
          %p179 = pneg %p80
        $region22: #{tpu_custom_call.1} parent=15 // pred_check_branch
          %181 = sbr.rel (%p179) target = $region24
        $region23: #{tpu_custom_call.1} parent=15 // pred_region
          %s182 = sand.u32 %s18, 1
          %s183 = scalar_lea.sflag [#allocation8], %s182
          %s184 = sand.u32 %s70, 1
          %s185 = smul.addr %s184, 8
          %s186 = scalar_lea.vmem [#allocation7], %s185
          %s188 = ssub.s32 128, 128
          %189 = vsyncadd %s183, %s188
          %s190 = smul.addr %s25, 2
          %s191 = sadd.s32 %s26, %s190
          %s192 = smul.addr %s191, 128
          %s193 = scalar_lea.hbm %s1, %s192
          %s195 = sshll.u32 %s186, 4
          %s196 = int_to_ptr.vmem [resolvable:$true] %s195
          %198 = dma.hbm_to_vmem [thread:$0]  %s193, 128, %s196, %s183
        $region24: #{tpu_custom_call.1} parent=15 // pred_fallthru
          _
        // Predicated region
        $region25: #{tpu_custom_call.1} parent=15 // pred_check
          %p199 = pneg %p108
        $region26: #{tpu_custom_call.1} parent=15 // pred_check_branch
          %201 = sbr.rel (%p199) target = $region28
        $region27: #{tpu_custom_call.1} parent=15 // pred_region
          %s202 = sand.u32 %s18, 1
          %s203 = scalar_lea.sflag [#allocation8], %s202
          %s204 = sand.u32 %s98, 1
          %s205 = smul.addr %s204, 8
          %s206 = scalar_lea.vmem [#allocation9], %s205
          %s208 = ssub.s32 128, 128
          %209 = vsyncadd %s203, %s208
          %s210 = smul.addr %s25, 2
          %s211 = sadd.s32 %s26, %s210
          %s212 = smul.addr %s211, 128
          %s213 = scalar_lea.hbm %s2, %s212
          %s215 = sshll.u32 %s206, 4
          %s216 = int_to_ptr.vmem [resolvable:$true] %s215
          %218 = dma.hbm_to_vmem [thread:$0]  %s213, 128, %s216, %s203
        $region28: #{tpu_custom_call.1} parent=15 // pred_fallthru
          _
      $region16: #{tpu_custom_call.1} parent=5 // pred_fallthru
        _
      %p219 = scmp.le.s32.totalorder 1, %s18
      %p220 = scmp.lt.s32.totalorder %s18, 5
      %p221 = pnand %p219, %p220
      %p222 = pneg %p221
      // Predicated region
      $region29: #{tpu_custom_call.1} parent=5 // pred_check
        _
      $region30: #{tpu_custom_call.1} parent=5 // pred_check_branch
        %224 = sbr.rel (%p221) target = $region32
      $region31: #{tpu_custom_call.1} parent=5 // pred_region
        %s225 = ssub.s32 %s18, 1
        %s226 = sand.u32 %s45, 1
        %s227 = scalar_lea.sflag [#allocation5], %s226
        %s228 = sand.u32 %s45, 1
        %s229 = smul.addr %s228, 8
        %s230 = scalar_lea.vmem [#allocation4], %s229
        // Predicated region
        $region33: #{tpu_custom_call.1} parent=31 // pred_check
          %p231 = pneg %p58
        $region34: #{tpu_custom_call.1} parent=31 // pred_check_branch
          %233 = sbr.rel (%p231) target = $region36
        $region35: #{tpu_custom_call.1} parent=31 // pred_region
          %234 = dma.done %s227, 128
        $region36: #{tpu_custom_call.1} parent=31 // pred_fallthru
          _
        %s235 = sand.u32 %s23, 1
        %s236 = scalar_lea.sflag [#allocation8], %s235
        %s237 = sand.u32 %s73, 1
        %s238 = smul.addr %s237, 8
        %s239 = scalar_lea.vmem [#allocation7], %s238
        // Predicated region
        $region37: #{tpu_custom_call.1} parent=31 // pred_check
          %p240 = pneg %p86
        $region38: #{tpu_custom_call.1} parent=31 // pred_check_branch
          %242 = sbr.rel (%p240) target = $region40
        $region39: #{tpu_custom_call.1} parent=31 // pred_region
          %243 = dma.done %s236, 128
        $region40: #{tpu_custom_call.1} parent=31 // pred_fallthru
          _
        %s244 = sand.u32 %s23, 1
        %s245 = scalar_lea.sflag [#allocation8], %s244
        %s246 = sand.u32 %s101, 1
        %s247 = smul.addr %s246, 8
        %s248 = scalar_lea.vmem [#allocation9], %s247
        // Predicated region
        $region41: #{tpu_custom_call.1} parent=31 // pred_check
          %p249 = pneg %p114
        $region42: #{tpu_custom_call.1} parent=31 // pred_check_branch
          %251 = sbr.rel (%p249) target = $region44
        $region43: #{tpu_custom_call.1} parent=31 // pred_region
          %252 = dma.done %s245, 128
        $region44: #{tpu_custom_call.1} parent=31 // pred_fallthru
          _
        %s253 = sand.u32 %s45, 1
        %s254 = scalar_lea.sflag [#allocation5], %s253
        %s255 = sand.u32 %s45, 1
        %s256 = smul.addr %s255, 8
        %s257 = scalar_lea.vmem [#allocation4], %s256
        %p258 = pneg %p58
        %p259 = pneg %p55
        %s260 = sand.u32 %s23, 1
        %s261 = scalar_lea.sflag [#allocation8], %s260
        %s262 = sand.u32 %s73, 1
        %s263 = smul.addr %s262, 8
        %s264 = scalar_lea.vmem [#allocation7], %s263
        %p265 = pneg %p86
        %p266 = pneg %p83
        %s267 = sand.u32 %s23, 1
        %s268 = scalar_lea.sflag [#allocation8], %s267
        %s269 = sand.u32 %s101, 1
        %s270 = smul.addr %s269, 8
        %s271 = scalar_lea.vmem [#allocation9], %s270
        %p272 = pneg %p114
        %p273 = pneg %p111
        %p274 = pneg %p140
        %p275 = pneg %p137
        %s276 = sand.u32 %s127, 1
        %s277 = scalar_lea.sflag [#allocation6], %s276
        %s278 = sand.u32 %s127, 1
        %s279 = smul.addr %s278, 8
        %s280 = scalar_lea.vmem [#allocation10], %s279
        %p281 = scmp.eq.s32.totalorder %s28, 0
        // Predicated region
        $region45: #{tpu_custom_call.1} parent=31 // pred_check
          %p282 = pneg %p281
        $region46: #{tpu_custom_call.1} parent=31 // pred_check_branch
          %284 = sbr.rel (%p282) target = $region48
        $region47: #{tpu_custom_call.1} parent=31 // pred_region
          %285 = vst [vmem:[#allocation2] sm:$0xff] 0.0
          %286 = vst [vmem:[#allocation3] sm:$0xff] 0.0
        $region48: #{tpu_custom_call.1} parent=31 // pred_fallthru
          _
        %v287 = vld [vmem:[%s230] sm:$0xff]
        %v288 = vld [vmem:[%s239] sm:$0xff]
        %v289 = vld [vmem:[%s248] sm:$0xff]
        %v290 = vmax.f32 %v287, 0.0
        %v291 = vmul.f32 %v287, %v288
        %v292 = vsub.f32 %v290, %v291
        %v293 = vand.u32 2147483647, %v287
        %v294 = vsub.f32 0.0, %v293
        %v295 = vmul.f32 %v294, 1.442695
        %v296 = vpow.pop %v295
        %v297 = vadd.f32 %v296, 1.0
        %v298 = vlog2.pop %v297
        %v299 = vmul.f32 %v298, 0.6931472
        %v300 = vmul.f32 -0.5, %v296
        %v301 = vadd.f32 %v300, 1.0
        %v302 = vmul.f32 %v301, %v296
        %v303 = vand.u32 2147483647, %v296
        %vm304 = vcmp.lt.f32.partialorder %v303, 0.0004427343
        %v305 = vsel %vm304, %v302, %v299
        %v306 = vadd.f32 %v292, %v305
        %v307 = vmul.f32 %v306, %v289
        %v308 = vld [vmem:[#allocation2] sm:$0xff]
        %v309 = vld [vmem:[#allocation3] sm:$0xff]
        %v310 = vadd.f32 %v308, %v307
        %v311 = vadd.f32 %v309, %v289
        %312 = vst [vmem:[#allocation2] sm:$0xff] %v310
        %313 = vst [vmem:[#allocation3] sm:$0xff] %v311
        %p314 = scmp.eq.s32.totalorder %s28, 1
        // Predicated region
        $region49: #{tpu_custom_call.1} parent=31 // pred_check
          %p315 = pneg %p314
        $region50: #{tpu_custom_call.1} parent=31 // pred_check_branch
          %317 = sbr.rel (%p315) target = $region52
        $region51: #{tpu_custom_call.1} parent=31 // pred_region
          %v318 = vld [vmem:[#allocation2] sm:$0xff]
          %319 = vadd.xlane.f32.xlu0 %v318
          %v320 = vpop.xlane.xlu0 %319
          %v321 = vld [vmem:[#allocation3] sm:$0xff]
          %322 = vadd.xlane.f32.xlu0 %v321
          %v323 = vpop.xlane.xlu0 %322
          %vm324 = vcmp.gt.f32.partialorder %v323, 0.0
          %v325 = vrcp.pop %v323
          %v326 = vmul.f32 %v320, %v325
          %v327 = vsel %vm324, %v326, 0.0
          %328 = vst [vmem:[%s280] sm:$0xff] %v327
        $region52: #{tpu_custom_call.1} parent=31 // pred_fallthru
          _
        %s329 = sand.u32 %s127, 1
        %s330 = scalar_lea.sflag [#allocation6], %s329
        %s331 = sand.u32 %s127, 1
        %s332 = smul.addr %s331, 8
        %s333 = scalar_lea.vmem [#allocation10], %s332
        // Predicated region
        $region53: #{tpu_custom_call.1} parent=31 // pred_check
          %p334 = pneg %p137
        $region54: #{tpu_custom_call.1} parent=31 // pred_check_branch
          %336 = sbr.rel (%p334) target = $region56
        $region55: #{tpu_custom_call.1} parent=31 // pred_region
          %s338 = ssub.s32 128, 128
          %339 = vsyncadd %s330, %s338
          %s340 = smul.addr %s27, 128
          %s341 = scalar_lea.hbm %s3, %s340
          %s343 = sshll.u32 %s333, 4
          %s344 = int_to_ptr.vmem [resolvable:$true] %s343
          %346 = dma.vmem_to_hbm [thread:$0]  %s344, 128, %s341, %s330
        $region56: #{tpu_custom_call.1} parent=31 // pred_fallthru
          _
      $region32: #{tpu_custom_call.1} parent=5 // pred_fallthru
        _
      %p347 = scmp.le.s32.totalorder 2, %s18
      // Predicated region
      $region57: #{tpu_custom_call.1} parent=5 // pred_check
        %p348 = pneg %p347
      $region58: #{tpu_custom_call.1} parent=5 // pred_check_branch
        %350 = sbr.rel (%p348) target = $region60
      $region59: #{tpu_custom_call.1} parent=5 // pred_region
        %s351 = ssub.s32 %s18, 2
        // Predicated region
        $region61: #{tpu_custom_call.1} parent=59 // pred_check
          %p352 = pneg %p143
        $region62: #{tpu_custom_call.1} parent=59 // pred_check_branch
          %354 = sbr.rel (%p352) target = $region64
        $region63: #{tpu_custom_call.1} parent=59 // pred_region
          %s355 = sand.u32 %s128, 1
          %s356 = scalar_lea.sflag [#allocation6], %s355
          %s357 = sand.u32 %s128, 1
          %s358 = smul.addr %s357, 8
          %s359 = scalar_lea.vmem [#allocation10], %s358
          %360 = dma.done %s356, 128
        $region64: #{tpu_custom_call.1} parent=59 // pred_fallthru
          _
      $region60: #{tpu_custom_call.1} parent=5 // pred_fallthru
        _
    $region6: #{tpu_custom_call.1} parent=1 // loop_footer
      %s22 = sadd.s32 1, %s18
    $region7: #{tpu_custom_call.1} parent=1 // loop_footer_branch
      %17 = sbr.rel target = $region3
    $region8: #{tpu_custom_call.1} parent=1 // loop_exit
      _
    %361 = vsyncpa [#allocation5], 1
    %s362 = scalar_lea.sflag [#allocation5], 1
    %363 = vsyncpa %s362, 1
    %364 = vsyncpa [#allocation8], 1
    %s365 = scalar_lea.sflag [#allocation8], 1
    %366 = vsyncpa %s365, 1
    %367 = vsyncpa [#allocation6], 1
    %s368 = scalar_lea.sflag [#allocation6], 1
    %369 = vsyncpa %s368, 1

</llo_original>
